<compile_context>
chip_gen: v6e
topology: v6e:2x2x1
jax: 0.10.0
libtpu: 0.0.40
codegen_flags: <defaults>
</compile_context>

<pallas_src>
import functools

import jax
import jax.numpy as jnp
from jax.experimental import pallas as pl
from jax.experimental.pallas import tpu as pltpu


def _enc_cnn_kernel(x_ref, w_ref, gamma_ref, beta_ref, out_ref, wins_ref,
                    *, B, D, K, L, eps, compute_dtype):
    """Fused Conv1d + train-stat BatchNorm + ReLU + full-length MaxPool.

    x_ref:     (B, T, D)  f32        full input
    w_ref:     (KDp, CB)  compute    conv weights for this channel block
    gamma_ref: (1, CB)    f32
    beta_ref:  (1, CB)    f32
    out_ref:   (B, CB)    f32        pooled encoding for this channel block
    wins_ref:  (B*L, KDp) f32 VMEM   im2col window operand (scratch)
    """
    # --- im2col in VMEM only (never in HBM). -------------------------------
    # Row b*L + l, columns [k*D, (k+1)*D) hold x[b, l + k, :]. The zero init
    # also covers the K*D..KDp contraction-padding columns.
    wins_ref[...] = jnp.zeros_like(wins_ref)
    x = x_ref[...]                                            # (B, T, D) f32
    for b in range(B):
        for k in range(K):
            wins_ref[b * L:(b + 1) * L, k * D:(k + 1) * D] = x[b, k:k + L, :]

    # --- Conv1d as ONE MXU contraction, f32 accumulation. -------------------
    lhs = wins_ref[...].astype(compute_dtype)                 # cast in-kernel
    y = jnp.dot(lhs, w_ref[...],
                preferred_element_type=jnp.float32)           # (B*L, CB) f32

    # --- Training-mode BatchNorm over the (batch, length) rows. -------------
    # Two-pass statistics (numerically safe); rsqrt uses the EUP slot.
    # The conv bias cancels exactly under batch-stat BN and was folded away.
    inv_n = 1.0 / float(B * L)
    mean = jnp.sum(y, axis=0, keepdims=True) * inv_n          # (1, CB)
    d = y - mean
    var = jnp.sum(d * d, axis=0, keepdims=True) * inv_n       # (1, CB)
    scale = gamma_ref[...] * jax.lax.rsqrt(var + eps)         # (1, CB)
    shift = beta_ref[...] - mean * scale

    # --- Fused affine + ReLU (dropout = eval-mode identity). ----------------
    z = jnp.maximum(y * scale + shift, 0.0)                   # (B*L, CB) f32

    # --- MaxPool1d over the whole conv length: per-batch row max. -----------
    for b in range(B):
        out_ref[b:b + 1, :] = jnp.max(z[b * L:(b + 1) * L, :],
                                      axis=0, keepdims=True)


def enc_cnn_forward(x, conv_w, conv_b, bn_gamma, bn_beta,
                    *, kernel_size, eps=1e-5, use_bf16=False):
    """x: (B, T, D); conv_w: (C, D, K); conv_b/bn_gamma/bn_beta: (C,) -> (B, C)."""
    B, T, D = x.shape
    C, D_w, K = conv_w.shape
    assert D_w == D and K == kernel_size
    L = T - K + 1                          # conv length == MaxPool1d window
    CB = 128                               # lane-dense channel block
    Cp = pl.cdiv(C, CB) * CB
    KD = K * D
    KDp = pl.cdiv(KD, 128) * 128           # padded contraction depth

    compute_dtype = jnp.bfloat16 if use_bf16 else jnp.float32

    # Weights as one (KDp, Cp) contraction operand: w2d[k*D + d, c] = conv_w[c, d, k].
    w2d = jnp.transpose(conv_w, (2, 1, 0)).reshape(KD, C).astype(jnp.float32)
    w2d = jnp.pad(w2d, ((0, KDp - KD), (0, Cp - C))).astype(compute_dtype)
    gamma = jnp.pad(bn_gamma.astype(jnp.float32), (0, Cp - C)).reshape(1, Cp)
    beta = jnp.pad(bn_beta.astype(jnp.float32), (0, Cp - C)).reshape(1, Cp)
    # Conv bias cancels exactly under training-mode (batch-stat) BatchNorm.
    del conv_b

    kernel = functools.partial(_enc_cnn_kernel, B=B, D=D, K=K, L=L,
                               eps=float(eps), compute_dtype=compute_dtype)

    out = pl.pallas_call(
        kernel,
        grid=(Cp // CB,),   # channel blocks; "parallel" -> both v7x TCs when Cp >= 256
        in_specs=[
            pl.BlockSpec((B, T, D), lambda c: (0, 0, 0)),   # full x every step
            pl.BlockSpec((KDp, CB), lambda c: (0, c)),      # weight channel block
            pl.BlockSpec((1, CB), lambda c: (0, c)),        # gamma block
            pl.BlockSpec((1, CB), lambda c: (0, c)),        # beta block
        ],
        out_specs=pl.BlockSpec((B, CB), lambda c: (0, c)),
        out_shape=jax.ShapeDtypeStruct((B, Cp), jnp.float32),
        scratch_shapes=[pltpu.VMEM((B * L, KDp), jnp.float32)],
        compiler_params=pltpu.CompilerParams(
            dimension_semantics=("parallel",),
            vmem_limit_bytes=32 * 1024 * 1024,   # sized for v7x's 64 MiB VMEM
        ),
    )(x.astype(jnp.float32), w2d, gamma, beta)

    return out[:, :C]


def _reference(x, conv_w, conv_b, bn_gamma, bn_beta, *, kernel_size, eps=1e-5):
    """Pure-JAX reference matching the PyTorch forward (eval-mode dropout)."""
    B, T, D = x.shape
    C, _, K = conv_w.shape
    L = T - K + 1
    windows = jnp.stack([x[:, k:k + L, :] for k in range(K)], axis=2)  # (B,L,K,D)
    conv = jnp.einsum('blkd,cdk->blc', windows, conv_w) + conv_b       # (B,L,C)
    mean = jnp.mean(conv, axis=(0, 1), keepdims=True)
    var = jnp.mean((conv - mean) ** 2, axis=(0, 1), keepdims=True)
    bn = (conv - mean) * jax.lax.rsqrt(var + eps) * bn_gamma + bn_beta
    act = jnp.maximum(bn, 0.0)
    return jnp.max(act, axis=1)                                        # (B,C)


if __name__ == "__main__":
    # Small shapes consistent with the module:
    #   batch=2, entext_len=8, en_dims=32, channels=16, kernel_size=3
    B, T, D = 2, 8, 32
    C, K = 16, 3

    key = jax.random.PRNGKey(0)
    kx, kw, kb, kg, kbe = jax.random.split(key, 5)

    x = jax.random.normal(kx, (B, T, D), dtype=jnp.float32)
    conv_w = jax.random.normal(kw, (C, D, K), dtype=jnp.float32) * 0.1
    conv_b = jax.random.normal(kb, (C,), dtype=jnp.float32) * 0.1
    bn_gamma = 1.0 + 0.1 * jax.random.normal(kg, (C,), dtype=jnp.float32)
    bn_beta = 0.1 * jax.random.normal(kbe, (C,), dtype=jnp.float32)

    ref = _reference(x, conv_w, conv_b, bn_gamma, bn_beta, kernel_size=K)

    # f32 path (exact comparison against the pure-JAX reference).
    out = enc_cnn_forward(x, conv_w, conv_b, bn_gamma, bn_beta, kernel_size=K)
    out = jax.block_until_ready(out)
    assert out.shape == (B, C)
    assert jnp.allclose(out, ref, atol=1e-4, rtol=1e-4), (out, ref)

    # bf16 MXU-operand path (v6e/v7x); elementwise/stat math stays f32.
    out_bf16 = enc_cnn_forward(x, conv_w, conv_b, bn_gamma, bn_beta,
                               kernel_size=K, use_bf16=True)
    out_bf16 = jax.block_until_ready(out_bf16)
    assert out_bf16.shape == (B, C)
    assert jnp.allclose(out_bf16, ref, atol=1e-1, rtol=1e-1), (out_bf16, ref)

    print("KERNEL_OK")
</pallas_src>

<mosaic_0001>
module attributes {stable_mosaic.version = 11 : i64} {
  func.func @_enc_cnn_kernel(%arg0: i32, %arg1: memref<2x8x32xf32, #tpu.memory_space<vmem>>, %arg2: memref<128x128xf32, #tpu.memory_space<vmem>>, %arg3: memref<1x128xf32, #tpu.memory_space<vmem>>, %arg4: memref<1x128xf32, #tpu.memory_space<vmem>>, %arg5: memref<2x128xf32, #tpu.memory_space<vmem>>, %arg6: memref<12x128xf32, #tpu.memory_space<vmem>>) attributes {dimension_semantics = [#tpu.dimension_semantics<parallel>], iteration_bounds = array<i64: 1>, scalar_prefetch = 0 : i64, scratch_operands = 1 : i64, tpu.core_type = #tpu.core_type<tc>, window_params = [{pipeline_mode = #tpu.pipeline_mode<synchronous>, transform_indices = @transform_0, window_bounds = array<i64: 2, 8, 32>}, {transform_indices = @transform_1, window_bounds = array<i64: 128, 128>}, {transform_indices = @transform_2, window_bounds = array<i64: 1, 128>}, {transform_indices = @transform_3, window_bounds = array<i64: 1, 128>}, {transform_indices = @transform_4, window_bounds = array<i64: 2, 128>}]} {
    %cst = arith.constant 0.000000e+00 : f32
    %0 = vector.broadcast %cst : f32 to vector<12x128xf32>
    %c0 = arith.constant 0 : index
    %c0_0 = arith.constant 0 : index
    %1 = vector.load %arg6[%c0, %c0_0] : memref<12x128xf32, #tpu.memory_space<vmem>>, vector<12x128xf32>
    tpu.vector_store %arg6[%c0, %c0_0], %0 {strides = array<i32>} : memref<12x128xf32, #tpu.memory_space<vmem>>, vector<12x128xf32>,
    %c0_1 = arith.constant 0 : index
    %c0_2 = arith.constant 0 : index
    %c0_3 = arith.constant 0 : index
    %2 = vector.load %arg1[%c0_1, %c0_2, %c0_3] : memref<2x8x32xf32, #tpu.memory_space<vmem>>, vector<2x8x32xf32>
    %3 = vector.extract_strided_slice %2 {offsets = [0, 0, 0], sizes = [1, 6, 32], strides = [1, 1, 1]} : vector<2x8x32xf32> to vector<1x6x32xf32>
    %4 = vector.shape_cast %3 : vector<1x6x32xf32> to vector<6x32xf32>
    %c0_4 = arith.constant 0 : index
    %c0_5 = arith.constant 0 : index
    %5 = vector.load %arg6[%c0_4, %c0_5] : memref<12x128xf32, #tpu.memory_space<vmem>>, vector<6x32xf32>
    tpu.vector_store %arg6[%c0_4, %c0_5], %4 {strides = array<i32>} : memref<12x128xf32, #tpu.memory_space<vmem>>, vector<6x32xf32>,
    %6 = vector.extract_strided_slice %2 {offsets = [0, 1, 0], sizes = [1, 6, 32], strides = [1, 1, 1]} : vector<2x8x32xf32> to vector<1x6x32xf32>
    %7 = vector.shape_cast %6 : vector<1x6x32xf32> to vector<6x32xf32>
    %c0_6 = arith.constant 0 : index
    %c32 = arith.constant 32 : index
    %8 = vector.load %arg6[%c0_6, %c32] : memref<12x128xf32, #tpu.memory_space<vmem>>, vector<6x32xf32>
    tpu.vector_store %arg6[%c0_6, %c32], %7 {strides = array<i32>} : memref<12x128xf32, #tpu.memory_space<vmem>>, vector<6x32xf32>,
    %9 = vector.extract_strided_slice %2 {offsets = [0, 2, 0], sizes = [1, 6, 32], strides = [1, 1, 1]} : vector<2x8x32xf32> to vector<1x6x32xf32>
    %10 = vector.shape_cast %9 : vector<1x6x32xf32> to vector<6x32xf32>
    %c0_7 = arith.constant 0 : index
    %c64 = arith.constant 64 : index
    %11 = vector.load %arg6[%c0_7, %c64] : memref<12x128xf32, #tpu.memory_space<vmem>>, vector<6x32xf32>
    tpu.vector_store %arg6[%c0_7, %c64], %10 {strides = array<i32>} : memref<12x128xf32, #tpu.memory_space<vmem>>, vector<6x32xf32>,
    %12 = vector.extract_strided_slice %2 {offsets = [1, 0, 0], sizes = [1, 6, 32], strides = [1, 1, 1]} : vector<2x8x32xf32> to vector<1x6x32xf32>
    %13 = vector.shape_cast %12 : vector<1x6x32xf32> to vector<6x32xf32>
    %c6 = arith.constant 6 : index
    %c0_8 = arith.constant 0 : index
    %14 = vector.load %arg6[%c6, %c0_8] : memref<12x128xf32, #tpu.memory_space<vmem>>, vector<6x32xf32>
    tpu.vector_store %arg6[%c6, %c0_8], %13 {strides = array<i32>} : memref<12x128xf32, #tpu.memory_space<vmem>>, vector<6x32xf32>,
    %15 = vector.extract_strided_slice %2 {offsets = [1, 1, 0], sizes = [1, 6, 32], strides = [1, 1, 1]} : vector<2x8x32xf32> to vector<1x6x32xf32>
    %16 = vector.shape_cast %15 : vector<1x6x32xf32> to vector<6x32xf32>
    %c6_9 = arith.constant 6 : index
    %c32_10 = arith.constant 32 : index
    %17 = vector.load %arg6[%c6_9, %c32_10] : memref<12x128xf32, #tpu.memory_space<vmem>>, vector<6x32xf32>
    tpu.vector_store %arg6[%c6_9, %c32_10], %16 {strides = array<i32>} : memref<12x128xf32, #tpu.memory_space<vmem>>, vector<6x32xf32>,
    %18 = vector.extract_strided_slice %2 {offsets = [1, 2, 0], sizes = [1, 6, 32], strides = [1, 1, 1]} : vector<2x8x32xf32> to vector<1x6x32xf32>
    %19 = vector.shape_cast %18 : vector<1x6x32xf32> to vector<6x32xf32>
    %c6_11 = arith.constant 6 : index
    %c64_12 = arith.constant 64 : index
    %20 = vector.load %arg6[%c6_11, %c64_12] : memref<12x128xf32, #tpu.memory_space<vmem>>, vector<6x32xf32>
    tpu.vector_store %arg6[%c6_11, %c64_12], %19 {strides = array<i32>} : memref<12x128xf32, #tpu.memory_space<vmem>>, vector<6x32xf32>,
    %c0_13 = arith.constant 0 : index
    %c0_14 = arith.constant 0 : index
    %21 = vector.load %arg6[%c0_13, %c0_14] : memref<12x128xf32, #tpu.memory_space<vmem>>, vector<12x128xf32>
    %c0_15 = arith.constant 0 : index
    %c0_16 = arith.constant 0 : index
    %22 = vector.load %arg2[%c0_15, %c0_16] : memref<128x128xf32, #tpu.memory_space<vmem>>, vector<128x128xf32>
    %cst_17 = arith.constant dense<0.000000e+00> : vector<12x128xf32>
    %23 = tpu.matmul %21, %22, %cst_17 {dimension_numbers = #tpu.dot_dimension_numbers<[1], [0], [0], [1], [0, 0, 1, 1], [], []>} : vector<12x128xf32>, vector<128x128xf32>, vector<12x128xf32> -> vector<12x128xf32>
    %cst_18 = arith.constant dense<0.000000e+00> : vector<128xf32>
    %24 = vector.multi_reduction <add>, %23, %cst_18 [0] : vector<12x128xf32> to vector<128xf32>
    %25 = vector.shape_cast %24 : vector<128xf32> to vector<1x128xf32>
    %cst_19 = arith.constant 0.0833333358 : f32
    %26 = vector.broadcast %cst_19 : f32 to vector<1x128xf32>
    %27 = arith.mulf %25, %26 : vector<1x128xf32>
    %28 = vector.broadcast %27 : vector<1x128xf32> to vector<12x128xf32>
    %29 = arith.subf %23, %28 : vector<12x128xf32>
    %30 = arith.mulf %29, %29 : vector<12x128xf32>
    %cst_20 = arith.constant dense<0.000000e+00> : vector<128xf32>
    %31 = vector.multi_reduction <add>, %30, %cst_20 [0] : vector<12x128xf32> to vector<128xf32>
    %32 = vector.shape_cast %31 : vector<128xf32> to vector<1x128xf32>
    %cst_21 = arith.constant 0.0833333358 : f32
    %33 = vector.broadcast %cst_21 : f32 to vector<1x128xf32>
    %34 = arith.mulf %32, %33 : vector<1x128xf32>
    %c0_22 = arith.constant 0 : index
    %c0_23 = arith.constant 0 : index
    %35 = vector.load %arg3[%c0_22, %c0_23] : memref<1x128xf32, #tpu.memory_space<vmem>>, vector<1x128xf32>
    %cst_24 = arith.constant 9.99999974E-6 : f32
    %36 = vector.broadcast %cst_24 : f32 to vector<1x128xf32>
    %37 = arith.addf %34, %36 : vector<1x128xf32>
    %38 = math.rsqrt %37 : vector<1x128xf32>
    %39 = arith.mulf %35, %38 : vector<1x128xf32>
    %c0_25 = arith.constant 0 : index
    %c0_26 = arith.constant 0 : index
    %40 = vector.load %arg4[%c0_25, %c0_26] : memref<1x128xf32, #tpu.memory_space<vmem>>, vector<1x128xf32>
    %41 = arith.mulf %27, %39 : vector<1x128xf32>
    %42 = arith.subf %40, %41 : vector<1x128xf32>
    %43 = vector.broadcast %39 : vector<1x128xf32> to vector<12x128xf32>
    %44 = arith.mulf %23, %43 : vector<12x128xf32>
    %45 = vector.broadcast %42 : vector<1x128xf32> to vector<12x128xf32>
    %46 = arith.addf %44, %45 : vector<12x128xf32>
    %cst_27 = arith.constant 0.000000e+00 : f32
    %47 = vector.broadcast %cst_27 : f32 to vector<12x128xf32>
    %48 = arith.maximumf %46, %47 : vector<12x128xf32>
    %49 = vector.extract_strided_slice %48 {offsets = [0, 0], sizes = [6, 128], strides = [1, 1]} : vector<12x128xf32> to vector<6x128xf32>
    %cst_28 = arith.constant dense<0xFF800000> : vector<128xf32>
    %50 = vector.multi_reduction <maximumf>, %49, %cst_28 [0] : vector<6x128xf32> to vector<128xf32>
    %51 = vector.shape_cast %50 : vector<128xf32> to vector<1x128xf32>
    %c0_29 = arith.constant 0 : index
    %c0_30 = arith.constant 0 : index
    %52 = vector.load %arg5[%c0_29, %c0_30] : memref<2x128xf32, #tpu.memory_space<vmem>>, vector<1x128xf32>
    tpu.vector_store %arg5[%c0_29, %c0_30], %51 {strides = array<i32>} : memref<2x128xf32, #tpu.memory_space<vmem>>, vector<1x128xf32>,
    %53 = vector.extract_strided_slice %48 {offsets = [6, 0], sizes = [6, 128], strides = [1, 1]} : vector<12x128xf32> to vector<6x128xf32>
    %cst_31 = arith.constant dense<0xFF800000> : vector<128xf32>
    %54 = vector.multi_reduction <maximumf>, %53, %cst_31 [0] : vector<6x128xf32> to vector<128xf32>
    %55 = vector.shape_cast %54 : vector<128xf32> to vector<1x128xf32>
    %c1 = arith.constant 1 : index
    %c0_32 = arith.constant 0 : index
    %56 = vector.load %arg5[%c1, %c0_32] : memref<2x128xf32, #tpu.memory_space<vmem>>, vector<1x128xf32>
    tpu.vector_store %arg5[%c1, %c0_32], %55 {strides = array<i32>} : memref<2x128xf32, #tpu.memory_space<vmem>>, vector<1x128xf32>,
    return
  }
  func.func @transform_0(%arg0: i32) -> (i32, i32, i32) {
    %c0_i32 = arith.constant 0 : i32
    %c0_i32_0 = arith.constant 0 : i32
    %c0_i32_1 = arith.constant 0 : i32
    %c0_i32_2 = arith.constant 0 : i32
    return %c0_i32, %c0_i32_0, %c0_i32_1 : i32, i32, i32
  }
  func.func @transform_1(%arg0: i32) -> (i32, i32) {
    %c0_i32 = arith.constant 0 : i32
    %c0_i32_0 = arith.constant 0 : i32
    return %c0_i32, %arg0 : i32, i32
  }
  func.func @transform_2(%arg0: i32) -> (i32, i32) {
    %c0_i32 = arith.constant 0 : i32
    %c0_i32_0 = arith.constant 0 : i32
    return %c0_i32, %arg0 : i32, i32
  }
  func.func @transform_3(%arg0: i32) -> (i32, i32) {
    %c0_i32 = arith.constant 0 : i32
    %c0_i32_0 = arith.constant 0 : i32
    return %c0_i32, %arg0 : i32, i32
  }
  func.func @transform_4(%arg0: i32) -> (i32, i32) {
    %c0_i32 = arith.constant 0 : i32
    %c0_i32_0 = arith.constant 0 : i32
    return %c0_i32, %arg0 : i32, i32
  }
}

</mosaic_0001>

<llo_original>
// kernel: tpu_custom_call.1
$region0: #{tpu_custom_call.1}
  #allocation0 [shape = 'u32[]', space=smem, size = 0x4, offset = 0x4, fixed_abs, tag = 'smem constant byte address 0x4 - core index']
  #allocation1 [shape = 'u32[144,128]{1,0:T(1,128)}', space=vmem, size = 0x12000, scoped, tag = 'internal scratch']
  #allocation2 [shape = 'f32[12,128]{1,0:T(8,128)}', space=vmem, size = 0x2000, scoped, tag = 'scratch operand']
  %s0 = inlined_call_operand.hbm [shape: f32[2,8,32], index: 0, kind: input, shape index: {}]
  %s1 = inlined_call_operand.hbm [shape: f32[128,128], index: 1, kind: input, shape index: {}]
  %s2 = inlined_call_operand.vmem [shape: f32[1,128], index: 2, kind: input, shape index: {}]
  %s3 = inlined_call_operand.vmem [shape: f32[1,128], index: 3, kind: input, shape index: {}]
  %s4 = inlined_call_operand.hbm [shape: f32[2,128], index: 4, kind: output, shape index: {}]
  %s5 = sld [smem:[#allocation0]]
  $region34: #{tpu_custom_call.1} parent=0
    _
  %s7 = ssub.s32 1, %s5
  %s8 = scalar_select 0, %s7, %s5
  $region1: #{tpu_custom_call.1} parent=0
    #allocation3 [shape = 'u8[8192]{0}', space=vmem, size = 0x2000, scoped, tag = 'input window, operand 0, single buffered']
    #allocation4 [shape = 's32[1]{0}', space=sflag, size = 0x4, scoped, tag = 'scoped memory for tpu_custom_call.1']
    #allocation5 [shape = 's32[1]{0}', space=sflag, size = 0x4, scoped, tag = 'scoped memory for tpu_custom_call.1']
    #allocation6 [shape = 'u8[65536]{0}', space=vmem, size = 0x10000, scoped, tag = 'input window, operand 1, single buffered']
    #allocation7 [shape = 's32[1]{0}', space=sflag, size = 0x4, scoped, tag = 'scoped memory for tpu_custom_call.1']
    #allocation8 [shape = 'u8[1024]{0}', space=vmem, size = 0x400, scoped, tag = 'output window, operand 0, single buffered']
    %9 = vsyncpa [#allocation4], 0
    %10 = vsyncpa [#allocation7], 0
    %11 = vsyncpa [#allocation5], 0
    // Predicated region
    $region2: #{tpu_custom_call.1} parent=1 // pred_check
      _
    $region3: #{tpu_custom_call.1} parent=1 // pred_check_branch
      %13 = sbr.rel (0) target = $region5
    $region4: #{tpu_custom_call.1} parent=1 // pred_region
      %s15 = ssub.s32 256, 256
      %16 = vsyncadd [#allocation4], %s15
      %s17 = sshll.u32 [#allocation3], 4
      %s18 = int_to_ptr.vmem [resolvable:$true] %s17
      %23 = dma.hbm_to_vmem [thread:$0]  %s0, 256, %s18, [#allocation4], 128, 128, 8
    $region5: #{tpu_custom_call.1} parent=1 // pred_fallthru
      _
    // Predicated region
    $region6: #{tpu_custom_call.1} parent=1 // pred_check
      _
    $region7: #{tpu_custom_call.1} parent=1 // pred_check_branch
      %25 = sbr.rel (0) target = $region9
    $region8: #{tpu_custom_call.1} parent=1 // pred_region
      %s27 = ssub.s32 2048, 2048
      %28 = vsyncadd [#allocation7], %s27
      %s29 = sshll.u32 [#allocation6], 4
      %s30 = int_to_ptr.vmem [resolvable:$true] %s29
      %35 = dma.hbm_to_vmem [thread:$0]  %s1, 2048, %s30, [#allocation7], 128, 128, 8
    $region9: #{tpu_custom_call.1} parent=1 // pred_fallthru
      _
    // Predicated region
    $region10: #{tpu_custom_call.1} parent=1 // pred_check
      _
    $region11: #{tpu_custom_call.1} parent=1 // pred_check_branch
      %37 = sbr.rel (0) target = $region13
    $region12: #{tpu_custom_call.1} parent=1 // pred_region
      _
    $region13: #{tpu_custom_call.1} parent=1 // pred_fallthru
      _
    // Predicated region
    $region14: #{tpu_custom_call.1} parent=1 // pred_check
      _
    $region15: #{tpu_custom_call.1} parent=1 // pred_check_branch
      %39 = sbr.rel (0) target = $region17
    $region16: #{tpu_custom_call.1} parent=1 // pred_region
      _
    $region17: #{tpu_custom_call.1} parent=1 // pred_fallthru
      _
    // Predicated region
    $region18: #{tpu_custom_call.1} parent=1 // pred_check
      _
    $region19: #{tpu_custom_call.1} parent=1 // pred_check_branch
      %41 = sbr.rel (0) target = $region21
    $region20: #{tpu_custom_call.1} parent=1 // pred_region
      %42 = dma.done [#allocation4], 256
    $region21: #{tpu_custom_call.1} parent=1 // pred_fallthru
      _
    // Predicated region
    $region22: #{tpu_custom_call.1} parent=1 // pred_check
      _
    $region23: #{tpu_custom_call.1} parent=1 // pred_check_branch
      %44 = sbr.rel (0) target = $region25
    $region24: #{tpu_custom_call.1} parent=1 // pred_region
      %45 = dma.done [#allocation7], 2048
    $region25: #{tpu_custom_call.1} parent=1 // pred_fallthru
      _
    %46 = vst [vmem:[#allocation2] sm:$0xff] 0.0
    %47 = vst [vmem:[#allocation2 + $0x8] sm:$0xf] 0.0
    %v48 = vld [vmem:[#allocation3] sm:$0xff]
    %v49 = vld [vmem:[#allocation3 + $0x8] sm:$0xff]
    %vm50 = vcmask 259072
    %51 = vst.msk [vmem:[#allocation2] sm:$0x3f] %vm50, %v48
    %53 = vrot.lane.b32.xlu0 %v48, 32
    %v54 = vpop.permute.xlu0 %53
    %vm56 = vcmask 522497
    %57 = vst.msk [vmem:[#allocation2 - $0x1] sm:$0x7e] %vm56, %v54
    %58 = vrot.lane.b32.xlu0 %v48, 64
    %v59 = vpop.permute.xlu0 %58
    %vm61 = vcmask 785922
    %62 = vst.msk [vmem:[#allocation2 - $0x2] sm:$0xfc] %vm61, %v59
    %63 = vst.msk [vmem:[#allocation2 + $0x6] sm:$0x3f] %vm50, %v49
    %65 = vrot.lane.b32.xlu0 %v49, 32
    %v66 = vpop.permute.xlu0 %65
    %68 = vst.msk [vmem:[#allocation2 + $0x5] sm:$0x7e] %vm56, %v66
    %69 = vrot.lane.b32.xlu0 %v49, 64
    %v70 = vpop.permute.xlu0 %69
    %72 = vst.msk [vmem:[#allocation2 + $0x4] sm:$0xfc] %vm61, %v70
    %v73 = vld [vmem:[#allocation2] sm:$0xff]
    %v74 = vld [vmem:[#allocation2 + $0x8] sm:$0xf]
    %v75 = vld [vmem:[#allocation6] sm:$0xff]
    %v76 = vld [vmem:[#allocation6 + $0x8] sm:$0xff]
    %v77 = vld [vmem:[#allocation6 + $0x10] sm:$0xff]
    %v78 = vld [vmem:[#allocation6 + $0x18] sm:$0xff]
    %v79 = vld [vmem:[#allocation6 + $0x20] sm:$0xff]
    %v80 = vld [vmem:[#allocation6 + $0x28] sm:$0xff]
    %v81 = vld [vmem:[#allocation6 + $0x30] sm:$0xff]
    %v82 = vld [vmem:[#allocation6 + $0x38] sm:$0xff]
    %v83 = vld [vmem:[#allocation6 + $0x40] sm:$0xff]
    %v84 = vld [vmem:[#allocation6 + $0x48] sm:$0xff]
    %v85 = vld [vmem:[#allocation6 + $0x50] sm:$0xff]
    %v86 = vld [vmem:[#allocation6 + $0x58] sm:$0xff]
    %v87 = vld [vmem:[#allocation6 + $0x60] sm:$0xff]
    %v88 = vld [vmem:[#allocation6 + $0x68] sm:$0xff]
    %v89 = vld [vmem:[#allocation6 + $0x70] sm:$0xff]
    %v90 = vld [vmem:[#allocation6 + $0x78] sm:$0xff]
    %91 = vmatprep.subr.mxu0 0.0
    %92 = vmatpush1.msra.mxu0 %v90
    %93 = vmatprep.subr.mxu0 0.0
    %94 = vmatpush1.msra.mxu0 %v89
    %95 = vmatprep.subr.mxu0 0.0
    %96 = vmatpush1.msra.mxu0 %v88
    %97 = vmatprep.subr.mxu0 0.0
    %98 = vmatpush1.msra.mxu0 %v87
    %99 = vmatprep.subr.mxu0 0.0
    %100 = vmatpush1.msra.mxu0 %v86
    %101 = vmatprep.subr.mxu0 0.0
    %102 = vmatpush1.msra.mxu0 %v85
    %103 = vmatprep.subr.mxu0 0.0
    %104 = vmatpush1.msra.mxu0 %v84
    %105 = vmatprep.subr.mxu0 0.0
    %106 = vmatpush1.msra.mxu0 %v83
    %107 = vmatprep.subr.mxu0 0.0
    %108 = vmatpush1.msra.mxu0 %v82
    %109 = vmatprep.subr.mxu0 0.0
    %110 = vmatpush1.msra.mxu0 %v81
    %111 = vmatprep.subr.mxu0 0.0
    %112 = vmatpush1.msra.mxu0 %v80
    %113 = vmatprep.subr.mxu0 0.0
    %114 = vmatpush1.msra.mxu0 %v79
    %115 = vmatprep.subr.mxu0 0.0
    %116 = vmatpush1.msra.mxu0 %v78
    %117 = vmatprep.subr.mxu0 0.0
    %118 = vmatpush1.msra.mxu0 %v77
    %119 = vmatprep.subr.mxu0 0.0
    %120 = vmatpush1.msra.mxu0 %v76
    %121 = vmatprep.subr.mxu0 0.0
    %122 = vmatpush1.msra.mxu0 %v75
    %123 = vmatprep.subr.mxu0 0.0
    %124 = vmatpush2.msra.mxu0 0.0
    %125 = vmatprep.subr.mxu0 0.0
    %126 = vmatpush2.msra.mxu0 0.0
    %127 = vmatprep.subr.mxu0 0.0
    %128 = vmatpush2.msra.mxu0 0.0
    %129 = vmatprep.subr.mxu0 0.0
    %130 = vmatpush2.msra.mxu0 0.0
    %131 = vmatprep.subr.mxu0 0.0
    %132 = vmatpush2.msra.mxu0 0.0
    %133 = vmatprep.subr.mxu0 0.0
    %134 = vmatpush2.msra.mxu0 0.0
    %135 = vmatprep.subr.mxu0 0.0
    %136 = vmatpush2.msra.mxu0 0.0
    %137 = vmatprep.subr.mxu0 0.0
    %138 = vmatpush2.msra.mxu0 0.0
    %139 = vmatprep.subr.mxu0 0.0
    %140 = vmatpush2.msra.mxu0 0.0
    %141 = vmatprep.subr.mxu0 0.0
    %142 = vmatpush2.msra.mxu0 0.0
    %143 = vmatprep.subr.mxu0 0.0
    %144 = vmatpush2.msra.mxu0 0.0
    %145 = vmatprep.subr.mxu0 0.0
    %146 = vmatpush2.msra.mxu0 0.0
    %147 = vmatprep.subr.mxu0 0.0
    %148 = vmatpush2.msra.mxu0 0.0
    %149 = vmatprep.subr.mxu0 0.0
    %150 = vmatpush2.msra.mxu0 0.0
    %151 = vmatprep.subr.mxu0 0.0
    %152 = vmatpush2.msra.mxu0 0.0
    %153 = vmatprep.subr.mxu0 0.0
    %154 = vmatpush2.msra.mxu0 0.0
    %155 = vmatprep.mubr.f32.mxu0 0.0
    %156 = vmatmul.mubr.f32.gmra.mxu0 %v73
    %v157 = vpop.f32.mrf.mxu0
    %v158 = vadd.f32 0.0, %v157
    %v159 = vpop.f32.mrf.mxu0
    %160 = vmatprep.mubr.f32.mxu0 0.0
    %161 = vmatmul.mubr.f32.gmra.mxu0 %v74
    %v162 = vpop.f32.mrf.mxu0
    %v163 = vadd.f32 0.0, %v162
    %v164 = vpop.f32.mrf.mxu0
    %165 = vdwg.mxu0
    %vm166 = vcmask 1043456
    %v167 = vsel %vm166, %v163, 0.0
    %v168 = vadd.f32 %v158, %v167
    %v169 = vrot.slane %v168, 4
    %v170 = vadd.f32 %v168, %v169
    %v171 = vrot.slane %v170, 2
    %v172 = vadd.f32 %v170, %v171
    %v173 = vrot.slane %v172, 1
    %v174 = vadd.f32 %v172, %v173
    %v175 = vmul.f32 %v174, 0.083333336
    %v176 = vsub.f32 %v158, %v175
    %v177 = vsub.f32 %v163, %v175
    %v178 = vmul.f32 %v176, %v176
    %v179 = vmul.f32 %v177, %v177
    %v180 = vsel %vm166, %v179, 0.0
    %v181 = vadd.f32 %v178, %v180
    %v182 = vrot.slane %v181, 4
    %v183 = vadd.f32 %v181, %v182
    %v184 = vrot.slane %v183, 2
    %v185 = vadd.f32 %v183, %v184
    %v186 = vrot.slane %v185, 1
    %v187 = vadd.f32 %v185, %v186
    %v188 = vmul.f32 %v187, 0.083333336
    %v189 = vld [vmem:[%s2] sm:$0x1]
    %v190 = vadd.f32 %v188, 1e-05
    %v191 = vrsqrt.pop %v190
    %v192 = vmul.f32 %v189, %v191
    %v193 = vld [vmem:[%s3] sm:$0x1]
    %v194 = vmul.f32 %v175, %v192
    %v195 = vsub.f32 %v193, %v194
    %v197 = vlaneseq
    %v198 = vshrl.u32 %v197, 7
    %v199 = vsub.s32 0, %v198
    %v200 = vrot.slane %v192, %v199
    %v202 = vmul.f32 %v158, %v200
    %v203 = vmul.f32 %v163, %v200
    %v205 = vlaneseq
    %v206 = vshrl.u32 %v205, 7
    %v207 = vsub.s32 0, %v206
    %v208 = vrot.slane %v195, %v207
    %v210 = vadd.f32 %v202, %v208
    %v211 = vadd.f32 %v203, %v208
    %v212 = vmax.f32 %v210, 0.0
    %v213 = vmax.f32 %v211, 0.0
    %vm214 = vcmask 1045504
    %v215 = vsel %vm214, %v212, -inf
    %v216 = vrot.slane %v215, 4
    %v217 = vmax.f32 %v215, %v216
    %v218 = vrot.slane %v217, 2
    %v219 = vmax.f32 %v217, %v218
    %v220 = vrot.slane %v219, 1
    %v221 = vmax.f32 %v219, %v220
    %222 = vst [vmem:[#allocation8] sm:$0x1] %v221
    %vm223 = vcmask 1047558
    %v224 = vsel %vm223, %v212, -inf
    %v225 = vsel %vm166, %v213, -inf
    %v226 = vmax.f32 %v224, %v225
    %v227 = vrot.slane %v226, 4
    %v228 = vmax.f32 %v226, %v227
    %v229 = vrot.slane %v228, 2
    %v230 = vmax.f32 %v228, %v229
    %v231 = vrot.slane %v230, 1
    %v232 = vmax.f32 %v230, %v231
    %233 = vst [vmem:[#allocation8 + $0x1] sm:$0x1] %v232
    // Predicated region
    $region26: #{tpu_custom_call.1} parent=1 // pred_check
      _
    $region27: #{tpu_custom_call.1} parent=1 // pred_check_branch
      %235 = sbr.rel (0) target = $region29
    $region28: #{tpu_custom_call.1} parent=1 // pred_region
      %s237 = ssub.s32 32, 32
      %238 = vsyncadd [#allocation5], %s237
      %s240 = sshll.u32 [#allocation8], 4
      %s241 = int_to_ptr.vmem [resolvable:$true] %s240
      %243 = dma.vmem_to_hbm [thread:$0]  %s241, 32, %s4, [#allocation5]
    $region29: #{tpu_custom_call.1} parent=1 // pred_fallthru
      _
    // Predicated region
    $region30: #{tpu_custom_call.1} parent=1 // pred_check
      _
    $region31: #{tpu_custom_call.1} parent=1 // pred_check_branch
      %245 = sbr.rel (0) target = $region33
    $region32: #{tpu_custom_call.1} parent=1 // pred_region
      %246 = dma.done [#allocation5], 32
    $region33: #{tpu_custom_call.1} parent=1 // pred_fallthru
      _
    %247 = vsyncpa [#allocation4], 1
    %248 = vsyncpa [#allocation7], 1
    %249 = vsyncpa [#allocation5], 1

</llo_original>
